<compile_context>
chip_gen: v7x
topology: tpu7x:2x2x1
jax: 0.10.0
libtpu: 0.0.40
codegen_flags: <defaults>
</compile_context>

<pallas_src>
import functools

import jax
import jax.numpy as jnp
from jax.experimental import pallas as pl
from jax.experimental.pallas import tpu as pltpu

_LANES = 128
_SUBLANES = 8
_CHUNK_ROWS = 512                 # compute-strip height (bounds in-kernel f32 temporaries)
_MIN_KERNEL_ROWS = 16             # below this, plain JAX is cheaper than a kernel launch
_VMEM_INPUT_BUDGET = 24 << 20     # budget for double-buffered input blocks (3 arrays x 2)


def _vfl_kernel(pred_ref, gt_ref, label_ref, out_ref, *,
                alpha, gamma, rows_tile, chunk_rows, valid_rows, need_mask, approx):
    """One grid step: reduce a (rows_tile, 128) slab to an (8, 128) partial sum."""

    def strip_partial(start_row):
        sl = pl.ds(start_row, chunk_rows)
        x = pred_ref[sl, :].astype(jnp.float32)      # logits
        z = gt_ref[sl, :].astype(jnp.float32)        # gt_score targets
        lab = label_ref[sl, :].astype(jnp.float32)   # label mask

        # Shared transcendental: e = exp(-|x|) feeds both sigmoid and the stable BCE.
        e = jnp.exp(-jnp.abs(x))
        inv = pl.reciprocal(1.0 + e, approx=approx)            # EUP reciprocal
        p = jnp.where(x >= 0.0, inv, e * inv)                   # sigmoid(x)

        pg = p * p if gamma == 2.0 else p ** gamma               # avoid pow for gamma==2
        t = alpha * pg
        weight = t + lab * (z - t)   # == alpha*p^gamma*(1-lab) + z*lab (fewer VALU ops)

        # Numerically stable BCE-with-logits (reduction='none'), reusing e:
        bce = jnp.maximum(x, 0.0) - x * z + jnp.log1p(e)
        contrib = bce * weight

        if need_mask:
            # Rows at/after `rem` in this strip come from the implicit partial-block read
            # (garbage / possibly NaN); one iota+compare+select discards them.
            rem = (valid_rows - pl.program_id(0) * rows_tile) - start_row   # scalar unit
            r = jax.lax.broadcasted_iota(jnp.int32, contrib.shape, 0)
            contrib = jnp.where(r < rem, contrib, 0.0)

        # (chunk, 128) -> (8, 128) via pure VALU vreg adds (no cross-lane work).
        return jnp.sum(
            contrib.reshape(chunk_rows // _SUBLANES, _SUBLANES, _LANES), axis=0)

    num_chunks = rows_tile // chunk_rows
    if num_chunks == 1:
        out_ref[...] = strip_partial(0)
    else:
        def body(i, acc):
            start = pl.multiple_of(i * chunk_rows, chunk_rows)
            return acc + strip_partial(start)

        out_ref[...] = jax.lax.fori_loop(
            0, num_chunks, body, jnp.zeros((_SUBLANES, _LANES), jnp.float32))


def _vfl_sum_jax(x, z, lab, alpha, gamma):
    """Plain-JAX sum of bce*weight (used for tiny inputs and the <128-element tail)."""
    x = x.astype(jnp.float32)
    z = z.astype(jnp.float32)
    lab = lab.astype(jnp.float32)
    p = jax.nn.sigmoid(x)
    pg = p * p if gamma == 2.0 else p ** gamma
    t = alpha * pg
    weight = t + lab * (z - t)
    bce = jnp.maximum(x, 0.0) - x * z + jnp.log1p(jnp.exp(-jnp.abs(x)))
    return jnp.sum(bce * weight)


def _choose_tile(rows, bytes_per_flat_elem, rows_tile_pref):
    """Pick the block height (rows per grid step) and grid size."""
    cap = max(_MIN_KERNEL_ROWS,
              _VMEM_INPUT_BUDGET // (2 * _LANES * bytes_per_flat_elem))
    tile = min(rows, cap)
    if rows_tile_pref is not None:
        tile = min(tile, int(rows_tile_pref))
    quantum = _CHUNK_ROWS if tile >= _CHUNK_ROWS else 16
    tile = max(16, (tile // quantum) * quantum)
    grid = -(-rows // tile)
    if grid == 1 and rows > _MIN_KERNEL_ROWS:
        # Keep >= 2 grid steps so the "parallel" axis can split across v7x's 2 TensorCores.
        half = -(-rows // 2)
        quantum = _CHUNK_ROWS if half >= _CHUNK_ROWS else 16
        tile = max(16, -(-half // quantum) * quantum)
        grid = -(-rows // tile)
    return tile, grid


def varifocal_loss(pred_score, gt_score, label, alpha=0.75, gamma=2.0,
                   rows_tile=None, approx_sigmoid=True):
    """Pallas TPU implementation of VarifocalLoss.forward.  Returns a float32 scalar."""
    assert pred_score.shape == gt_score.shape == label.shape
    assert pred_score.ndim == 3, "expected (batch, anchors, classes)"
    _, n_anchors, _ = pred_score.shape
    inv_n = 1.0 / float(n_anchors)
    alpha = float(alpha)
    gamma = float(gamma)

    flat_p = pred_score.reshape(-1)
    flat_g = gt_score.reshape(-1)
    flat_l = label.reshape(-1)

    total = int(flat_p.shape[0])
    main = (total // _LANES) * _LANES
    rows = main // _LANES

    if rows < _MIN_KERNEL_ROWS:
        # Tiny input (< 2048 elements): a kernel launch is not worth it.
        return _vfl_sum_jax(flat_p, flat_g, flat_l, alpha, gamma) * inv_n

    # Ragged < 128-element tail summed in plain JAX (no full-array pad / copy).
    tail = total - main
    tail_sum = jnp.float32(0.0)
    if tail:
        tail_sum = _vfl_sum_jax(flat_p[main:], flat_g[main:], flat_l[main:], alpha, gamma)
        flat_p, flat_g, flat_l = flat_p[:main], flat_g[:main], flat_l[:main]

    xp = flat_p.reshape(rows, _LANES)   # free reshape when tail == 0 (the common case)
    zp = flat_g.reshape(rows, _LANES)
    lp = flat_l.reshape(rows, _LANES)

    bytes_per_flat_elem = sum(jnp.dtype(a.dtype).itemsize for a in (xp, zp, lp))
    tile, grid = _choose_tile(rows, bytes_per_flat_elem, rows_tile)
    chunk = min(_CHUNK_ROWS, tile)
    need_mask = (grid * tile) != rows

    kernel = functools.partial(
        _vfl_kernel,
        alpha=alpha, gamma=gamma, rows_tile=tile, chunk_rows=chunk,
        valid_rows=rows, need_mask=bool(need_mask), approx=bool(approx_sigmoid),
    )

    cost = pl.CostEstimate(
        flops=20 * main,
        transcendentals=3 * main,
        bytes_accessed=main * bytes_per_flat_elem + grid * _SUBLANES * _LANES * 4,
    )

    # Raise the scoped-VMEM limit only when the double-buffered input blocks need it
    # (v5e's default is 16 MiB); the fixed 512-row compute strips keep temporaries small.
    vmem_needed = 2 * tile * _LANES * bytes_per_flat_elem + (6 << 20)
    compiler_kwargs = dict(dimension_semantics=("parallel",))
    if vmem_needed > (16 << 20):
        compiler_kwargs["vmem_limit_bytes"] = int(vmem_needed)

    partials = pl.pallas_call(
        kernel,
        out_shape=jax.ShapeDtypeStruct((grid * _SUBLANES, _LANES), jnp.float32),
        grid=(grid,),
        in_specs=[
            pl.BlockSpec((tile, _LANES), lambda i: (i, 0)),
            pl.BlockSpec((tile, _LANES), lambda i: (i, 0)),
            pl.BlockSpec((tile, _LANES), lambda i: (i, 0)),
        ],
        out_specs=pl.BlockSpec((_SUBLANES, _LANES), lambda i: (i, 0)),
        compiler_params=pltpu.CompilerParams(**compiler_kwargs),
        cost_estimate=cost,
    )(xp, zp, lp)

    return (jnp.sum(partials) + tail_sum) * inv_n


def varifocal_loss_ref(pred_score, gt_score, label, alpha=0.75, gamma=2.0):
    """Pure-JAX reference mirroring the PyTorch forward."""
    x = pred_score.astype(jnp.float32)
    z = gt_score.astype(jnp.float32)
    lab = label.astype(jnp.float32)
    weight = alpha * jax.nn.sigmoid(x) ** gamma * (1.0 - lab) + z * lab
    bce = jnp.maximum(x, 0.0) - x * z + jnp.log1p(jnp.exp(-jnp.abs(x)))
    return (bce * weight).mean(axis=1).sum()


if __name__ == "__main__":
    key = jax.random.PRNGKey(0)

    def make_inputs(case_key, B, N, C, dtype):
        k1, k2, k3 = jax.random.split(case_key, 3)
        pred = (jax.random.normal(k1, (B, N, C), dtype=jnp.float32) * 2.0).astype(dtype)
        gt = jax.random.uniform(k2, (B, N, C), dtype=jnp.float32).astype(dtype)
        lab = jax.random.bernoulli(k3, p=0.3, shape=(B, N, C)).astype(dtype)
        return pred, gt, lab

    cases = [
        # (B, N,  C,  dtype)           path exercised
        (2, 8, 128, jnp.bfloat16),   # lane-aligned bf16 stream: no mask, no tail
        (2, 24, 80, jnp.float32),    # rows=30 -> grid=2 with partial last block (mask path)
        (2, 13, 80, jnp.float32),    # total=2080 -> 32-element ragged tail summed in JAX
        (1, 4, 80, jnp.float32),     # tiny input -> plain-JAX fallback path
    ]

    for idx, (B, N, C, dtype) in enumerate(cases):
        pred, gt, lab = make_inputs(jax.random.fold_in(key, idx), B, N, C, dtype)
        out = jax.block_until_ready(varifocal_loss(pred, gt, lab))
        ref = jax.block_until_ready(varifocal_loss_ref(pred, gt, lab))
        assert jnp.allclose(out, ref, rtol=5e-3, atol=5e-2), (
            f"mismatch case={idx} shape=({B},{N},{C}) dtype={dtype}: {out} vs {ref}")

    print("KERNEL_OK")
</pallas_src>

<mosaic_0001>
module attributes {stable_mosaic.version = 11 : i64} {
  func.func @_vfl_kernel(%arg0: i32, %arg1: memref<16x128xbf16, #tpu.memory_space<vmem>>, %arg2: memref<16x128xbf16, #tpu.memory_space<vmem>>, %arg3: memref<16x128xbf16, #tpu.memory_space<vmem>>, %arg4: memref<8x128xf32, #tpu.memory_space<vmem>>) attributes {dimension_semantics = [#tpu.dimension_semantics<parallel>], iteration_bounds = array<i64: 1>, scalar_prefetch = 0 : i64, scratch_operands = 0 : i64, tpu.core_type = #tpu.core_type<tc>, window_params = [{transform_indices = @transform_0, window_bounds = array<i64: 16, 128>}, {transform_indices = @transform_1, window_bounds = array<i64: 16, 128>}, {transform_indices = @transform_2, window_bounds = array<i64: 16, 128>}, {transform_indices = @transform_3, window_bounds = array<i64: 8, 128>}]} {
    %c0 = arith.constant 0 : index
    %c0_0 = arith.constant 0 : index
    %0 = vector.load %arg1[%c0, %c0_0] : memref<16x128xbf16, #tpu.memory_space<vmem>>, vector<16x128xbf16>
    %1 = arith.extf %0 : vector<16x128xbf16> to vector<16x128xf32>
    %c0_1 = arith.constant 0 : index
    %c0_2 = arith.constant 0 : index
    %2 = vector.load %arg2[%c0_1, %c0_2] : memref<16x128xbf16, #tpu.memory_space<vmem>>, vector<16x128xbf16>
    %3 = arith.extf %2 : vector<16x128xbf16> to vector<16x128xf32>
    %c0_3 = arith.constant 0 : index
    %c0_4 = arith.constant 0 : index
    %4 = vector.load %arg3[%c0_3, %c0_4] : memref<16x128xbf16, #tpu.memory_space<vmem>>, vector<16x128xbf16>
    %5 = arith.extf %4 : vector<16x128xbf16> to vector<16x128xf32>
    %6 = math.absf %1 : vector<16x128xf32>
    %cst = arith.constant 0.000000e+00 : f32
    %7 = vector.broadcast %cst : f32 to vector<16x128xf32>
    %8 = arith.subf %7, %6 : vector<16x128xf32>
    %9 = math.exp %8 : vector<16x128xf32>
    %cst_5 = arith.constant 1.000000e+00 : f32
    %10 = vector.broadcast %cst_5 : f32 to vector<16x128xf32>
    %11 = arith.addf %10, %9 : vector<16x128xf32>
    %12 = tpu.reciprocal %11 {approx = true} : vector<16x128xf32> -> vector<16x128xf32>
    %cst_6 = arith.constant 0.000000e+00 : f32
    %13 = vector.broadcast %cst_6 : f32 to vector<16x128xf32>
    %14 = arith.cmpf oge, %1, %13 : vector<16x128xf32>
    %15 = arith.mulf %9, %12 : vector<16x128xf32>
    %16 = arith.select %14, %12, %15 : vector<16x128xi1>, vector<16x128xf32>
    %17 = arith.mulf %16, %16 : vector<16x128xf32>
    %cst_7 = arith.constant 7.500000e-01 : f32
    %18 = vector.broadcast %cst_7 : f32 to vector<16x128xf32>
    %19 = arith.mulf %18, %17 : vector<16x128xf32>
    %20 = arith.subf %3, %19 : vector<16x128xf32>
    %21 = arith.mulf %5, %20 : vector<16x128xf32>
    %22 = arith.addf %19, %21 : vector<16x128xf32>
    %cst_8 = arith.constant 0.000000e+00 : f32
    %23 = vector.broadcast %cst_8 : f32 to vector<16x128xf32>
    %24 = arith.maximumf %1, %23 : vector<16x128xf32>
    %25 = arith.mulf %1, %3 : vector<16x128xf32>
    %26 = arith.subf %24, %25 : vector<16x128xf32>
    %27 = math.log1p %9 : vector<16x128xf32>
    %28 = arith.addf %26, %27 : vector<16x128xf32>
    %29 = arith.mulf %28, %22 : vector<16x128xf32>
    %30 = vector.shape_cast %29 : vector<16x128xf32> to vector<2x8x128xf32>
    %cst_9 = arith.constant dense<0.000000e+00> : vector<8x128xf32>
    %31 = vector.multi_reduction <add>, %30, %cst_9 [0] : vector<2x8x128xf32> to vector<8x128xf32>
    %c0_10 = arith.constant 0 : index
    %c0_11 = arith.constant 0 : index
    %32 = vector.load %arg4[%c0_10, %c0_11] : memref<8x128xf32, #tpu.memory_space<vmem>>, vector<8x128xf32>
    tpu.vector_store %arg4[%c0_10, %c0_11], %31 {strides = array<i32>} : memref<8x128xf32, #tpu.memory_space<vmem>>, vector<8x128xf32>,
    return
  }
  func.func @transform_0(%arg0: i32) -> (i32, i32) {
    %c0_i32 = arith.constant 0 : i32
    %c0_i32_0 = arith.constant 0 : i32
    return %arg0, %c0_i32 : i32, i32
  }
  func.func @transform_1(%arg0: i32) -> (i32, i32) {
    %c0_i32 = arith.constant 0 : i32
    %c0_i32_0 = arith.constant 0 : i32
    return %arg0, %c0_i32 : i32, i32
  }
  func.func @transform_2(%arg0: i32) -> (i32, i32) {
    %c0_i32 = arith.constant 0 : i32
    %c0_i32_0 = arith.constant 0 : i32
    return %arg0, %c0_i32 : i32, i32
  }
  func.func @transform_3(%arg0: i32) -> (i32, i32) {
    %c0_i32 = arith.constant 0 : i32
    %c0_i32_0 = arith.constant 0 : i32
    return %arg0, %c0_i32 : i32, i32
  }
}

</mosaic_0001>

<llo_original>
// kernel: tpu_custom_call.1
$region0: #{tpu_custom_call.1}
  #allocation0 [shape = 'u32[]', space=smem, size = 0x4, offset = 0x4, fixed_abs, tag = 'smem constant byte address 0x4 - core index']
  #allocation1 [shape = 'u32[144,128]{1,0:T(1,128)}', space=vmem, size = 0x12000, scoped, tag = 'internal scratch']
  %s0 = inlined_call_operand.hbm [shape: bf16[16,128], index: 0, kind: input, shape index: {}]
  %s1 = inlined_call_operand.hbm [shape: bf16[16,128], index: 1, kind: input, shape index: {}]
  %s2 = inlined_call_operand.hbm [shape: bf16[16,128], index: 2, kind: input, shape index: {}]
  %s3 = inlined_call_operand.hbm [shape: f32[8,128], index: 3, kind: output, shape index: {}]
  %s4 = sld [smem:[#allocation0]]
  $region34: #{tpu_custom_call.1} parent=0
    _
  %s6 = ssub.s32 1, %s4
  %s7 = scalar_select 0, %s6, %s4
  $region1: #{tpu_custom_call.1} parent=0
    #allocation2 [shape = 'u8[4096]{0}', space=vmem, size = 0x1000, scoped, tag = 'input window, operand 0, single buffered']
    #allocation3 [shape = 's32[1]{0}', space=sflag, size = 0x4, scoped, tag = 'scoped memory for tpu_custom_call.1']
    #allocation4 [shape = 's32[1]{0}', space=sflag, size = 0x4, scoped, tag = 'scoped memory for tpu_custom_call.1']
    #allocation5 [shape = 'u8[4096]{0}', space=vmem, size = 0x1000, scoped, tag = 'input window, operand 1, single buffered']
    #allocation6 [shape = 's32[1]{0}', space=sflag, size = 0x4, scoped, tag = 'scoped memory for tpu_custom_call.1']
    #allocation7 [shape = 'u8[4096]{0}', space=vmem, size = 0x1000, scoped, tag = 'input window, operand 2, single buffered']
    #allocation8 [shape = 'u8[4096]{0}', space=vmem, size = 0x1000, scoped, tag = 'output window, operand 0, single buffered']
    %8 = vsyncpa [#allocation3], 0
    %9 = vsyncpa [#allocation6], 0
    %10 = vsyncpa [#allocation4], 0
    // Predicated region
    $region2: #{tpu_custom_call.1} parent=1 // pred_check
      _
    $region3: #{tpu_custom_call.1} parent=1 // pred_check_branch
      %12 = sbr.rel (0) target = $region5
    $region4: #{tpu_custom_call.1} parent=1 // pred_region
      %s14 = ssub.s32 128, 128
      %15 = vsyncadd [#allocation3], %s14
      %s16 = sshll.u32 [#allocation2], 4
      %s17 = int_to_ptr.vmem [resolvable:$true] %s16
      %22 = dma.hbm_to_vmem [thread:$0]  %s0, 128, %s17, [#allocation3], 64, 64, 4
    $region5: #{tpu_custom_call.1} parent=1 // pred_fallthru
      _
    // Predicated region
    $region6: #{tpu_custom_call.1} parent=1 // pred_check
      _
    $region7: #{tpu_custom_call.1} parent=1 // pred_check_branch
      %24 = sbr.rel (0) target = $region9
    $region8: #{tpu_custom_call.1} parent=1 // pred_region
      %s26 = ssub.s32 128, 128
      %27 = vsyncadd [#allocation6], %s26
      %s28 = sshll.u32 [#allocation5], 4
      %s29 = int_to_ptr.vmem [resolvable:$true] %s28
      %34 = dma.hbm_to_vmem [thread:$0]  %s1, 128, %s29, [#allocation6], 64, 64, 4
    $region9: #{tpu_custom_call.1} parent=1 // pred_fallthru
      _
    // Predicated region
    $region10: #{tpu_custom_call.1} parent=1 // pred_check
      _
    $region11: #{tpu_custom_call.1} parent=1 // pred_check_branch
      %36 = sbr.rel (0) target = $region13
    $region12: #{tpu_custom_call.1} parent=1 // pred_region
      %s38 = ssub.s32 128, 128
      %39 = vsyncadd [#allocation6], %s38
      %s40 = sshll.u32 [#allocation7], 4
      %s41 = int_to_ptr.vmem [resolvable:$true] %s40
      %46 = dma.hbm_to_vmem [thread:$0]  %s2, 128, %s41, [#allocation6], 64, 64, 4
    $region13: #{tpu_custom_call.1} parent=1 // pred_fallthru
      _
    // Predicated region
    $region14: #{tpu_custom_call.1} parent=1 // pred_check
      _
    $region15: #{tpu_custom_call.1} parent=1 // pred_check_branch
      %48 = sbr.rel (0) target = $region17
    $region16: #{tpu_custom_call.1} parent=1 // pred_region
      %49 = dma.done [#allocation3], 128
    $region17: #{tpu_custom_call.1} parent=1 // pred_fallthru
      _
    // Predicated region
    $region18: #{tpu_custom_call.1} parent=1 // pred_check
      _
    $region19: #{tpu_custom_call.1} parent=1 // pred_check_branch
      %51 = sbr.rel (0) target = $region21
    $region20: #{tpu_custom_call.1} parent=1 // pred_region
      %52 = dma.done [#allocation6], 128
    $region21: #{tpu_custom_call.1} parent=1 // pred_fallthru
      _
    // Predicated region
    $region22: #{tpu_custom_call.1} parent=1 // pred_check
      _
    $region23: #{tpu_custom_call.1} parent=1 // pred_check_branch
      %54 = sbr.rel (0) target = $region25
    $region24: #{tpu_custom_call.1} parent=1 // pred_region
      %55 = dma.done [#allocation6], 128
    $region25: #{tpu_custom_call.1} parent=1 // pred_fallthru
      _
    %v56 = vld [vmem:[#allocation2] sm:$0xf]
    %v57 = vld [vmem:[#allocation2 + $0x4] sm:$0xf]
    %v58 = vunpack.c.l.bf16 %v56
    %v59 = vunpack.c.l.bf16 %v57
    %v60 = vld [vmem:[#allocation5] sm:$0xf]
    %v61 = vld [vmem:[#allocation5 + $0x4] sm:$0xf]
    %v62 = vunpack.c.l.bf16 %v60
    %v63 = vunpack.c.l.bf16 %v61
    %v64 = vld [vmem:[#allocation7] sm:$0xf]
    %v65 = vld [vmem:[#allocation7 + $0x4] sm:$0xf]
    %v66 = vunpack.c.l.bf16 %v64
    %v67 = vunpack.c.l.bf16 %v65
    %v68 = vand.u32 2147483647, %v58
    %v69 = vand.u32 2147483647, %v59
    %v70 = vsub.f32 0.0, %v68
    %v71 = vsub.f32 0.0, %v69
    %v72 = vmul.f32 %v70, 1.442695
    %v73 = vpow.pop %v72
    %v74 = vmul.f32 %v71, 1.442695
    %v75 = vpow.pop %v74
    %v76 = vadd.f32 %v73, 1.0
    %v77 = vadd.f32 %v75, 1.0
    %v78 = vrcp.pop %v76
    %v79 = vrcp.pop %v77
    %vm80 = vcmp.ge.f32.partialorder %v58, 0.0
    %vm81 = vcmp.ge.f32.partialorder %v59, 0.0
    %v82 = vmul.f32 %v73, %v78
    %v83 = vmul.f32 %v75, %v79
    %v84 = vsel %vm80, %v78, %v82
    %v85 = vsel %vm81, %v79, %v83
    %v86 = vmul.f32 %v84, %v84
    %v87 = vmul.f32 %v85, %v85
    %v88 = vmul.f32 %v86, 0.75
    %v89 = vmul.f32 %v87, 0.75
    %v90 = vsub.f32 %v62, %v88
    %v91 = vsub.f32 %v63, %v89
    %v92 = vmul.f32 %v66, %v90
    %v93 = vmul.f32 %v67, %v91
    %v94 = vadd.f32 %v88, %v92
    %v95 = vadd.f32 %v89, %v93
    %v96 = vmax.f32 %v58, 0.0
    %v97 = vmax.f32 %v59, 0.0
    %v98 = vmul.f32 %v58, %v62
    %v99 = vmul.f32 %v59, %v63
    %v100 = vsub.f32 %v96, %v98
    %v101 = vsub.f32 %v97, %v99
    %v102 = vadd.f32 %v73, 1.0
    %v103 = vlog2.pop %v102
    %v104 = vmul.f32 %v103, 0.6931472
    %v105 = vmul.f32 -0.5, %v73
    %v106 = vadd.f32 %v105, 1.0
    %v107 = vmul.f32 %v106, %v73
    %v108 = vand.u32 2147483647, %v73
    %vm109 = vcmp.lt.f32.partialorder %v108, 0.0004427343
    %v110 = vsel %vm109, %v107, %v104
    %v111 = vadd.f32 %v75, 1.0
    %v112 = vlog2.pop %v111
    %v113 = vmul.f32 %v112, 0.6931472
    %v114 = vmul.f32 -0.5, %v75
    %v115 = vadd.f32 %v114, 1.0
    %v116 = vmul.f32 %v115, %v75
    %v117 = vand.u32 2147483647, %v75
    %vm118 = vcmp.lt.f32.partialorder %v117, 0.0004427343
    %v119 = vsel %vm118, %v116, %v113
    %v120 = vadd.f32 %v100, %v110
    %v121 = vadd.f32 %v101, %v119
    %v122 = vmul.f32 %v120, %v94
    %v123 = vmul.f32 %v121, %v95
    %v124 = vadd.f32 %v122, %v123
    %125 = vst [vmem:[#allocation8] sm:$0xff] %v124
    // Predicated region
    $region26: #{tpu_custom_call.1} parent=1 // pred_check
      _
    $region27: #{tpu_custom_call.1} parent=1 // pred_check_branch
      %127 = sbr.rel (0) target = $region29
    $region28: #{tpu_custom_call.1} parent=1 // pred_region
      %s129 = ssub.s32 128, 128
      %130 = vsyncadd [#allocation4], %s129
      %s132 = sshll.u32 [#allocation8], 4
      %s133 = int_to_ptr.vmem [resolvable:$true] %s132
      %135 = dma.vmem_to_hbm [thread:$0]  %s133, 128, %s3, [#allocation4]
    $region29: #{tpu_custom_call.1} parent=1 // pred_fallthru
      _
    // Predicated region
    $region30: #{tpu_custom_call.1} parent=1 // pred_check
      _
    $region31: #{tpu_custom_call.1} parent=1 // pred_check_branch
      %137 = sbr.rel (0) target = $region33
    $region32: #{tpu_custom_call.1} parent=1 // pred_region
      %138 = dma.done [#allocation4], 128
    $region33: #{tpu_custom_call.1} parent=1 // pred_fallthru
      _
    %139 = vsyncpa [#allocation3], 1
    %140 = vsyncpa [#allocation6], 1
    %141 = vsyncpa [#allocation4], 1

</llo_original>
